<compile_context>
chip_gen: v7x
topology: tpu7x:2x2x1
jax: 0.10.0
libtpu: 0.0.40
codegen_flags: <defaults>
</compile_context>

<pallas_src>
import jax
import jax.numpy as jnp
from jax.experimental import pallas as pl
from jax.experimental.pallas import tpu as pltpu

BN_EPS = 1e-5
NEG_SLOPE = 0.01      # nn.LeakyReLU default
NORM_EPS = 1e-12      # F.normalize default
K_TILE = 512          # D_in (reduction) tile when W^T is streamed


def _round_up(a, b):
    return ((a + b - 1) // b) * b


def _row_align(dtype):
    # Sublane packing: f32 -> 8 rows per vreg, bf16 -> 16, int8/fp8 -> 32.
    return max(8, 32 // jnp.dtype(dtype).itemsize)


def _k_tiling(d_in):
    """Lane-pad D_in; if K-tiled, also pad to a multiple of K_TILE."""
    d_in_p = _round_up(d_in, 128)
    if d_in_p > K_TILE:
        d_in_p = _round_up(d_in_p, K_TILE)
        return d_in_p, K_TILE
    return d_in_p, d_in_p


def _vmem_budget_bytes():
    """Per-TensorCore VMEM budget with headroom, derived from the chip."""
    cap = 64 * 1024 * 1024
    try:
        cap = int(getattr(pltpu.get_tpu_info(), "vmem_capacity_bytes", cap))
    except Exception:
        pass
    if cap <= 64 * 1024 * 1024:          # v7x class: 64 MiB per TC
        return 48 * 1024 * 1024
    return 100 * 1024 * 1024             # v5e / v6e: 128 MiB


def _block_spec(shape, index_map, buffers=None):
    """BlockSpec with optional explicit buffer count (graceful fallback)."""
    if buffers is not None:
        try:
            return pl.BlockSpec(shape, index_map,
                                pipeline_mode=pl.Buffered(buffers))
        except TypeError:
            pass
    return pl.BlockSpec(shape, index_map)


def eu_kernel(x_ref, w_ref, p_ref, o_ref, acc_ref):
    k = pl.program_id(1)

    @pl.when(k == 0)
    def _():
        acc_ref[...] = jnp.zeros_like(acc_ref)

    # Linear (MXU), f32 accumulation; x/W may be bf16.
    acc_ref[...] += jnp.dot(x_ref[...], w_ref[...],
                            preferred_element_type=jnp.float32)

    @pl.when(k == pl.num_programs(1) - 1)
    def _():
        y = acc_ref[...] + p_ref[0:1, :]            # + bias
        y = jnp.maximum(y, NEG_SLOPE * y)           # LeakyReLU (slope < 1)
        y = y * p_ref[1:2, :] + p_ref[2:3, :]       # folded eval-mode BN
        # Dropout: identity in eval mode.
        ss = jnp.sum(y * y, axis=-1, keepdims=True)  # F.normalize(dim=-1)
        inv = jax.lax.rsqrt(jnp.maximum(ss, NORM_EPS * NORM_EPS))
        o_ref[...] = (y * inv).astype(o_ref.dtype)


def prepare_eu_params(weight, bias, gamma, beta, running_mean, running_var,
                      *, mxu_dtype=jnp.bfloat16):
    """One-time prep: transpose/pad W (in MXU dtype), fold BN, stack params."""
    D_out, D_in = weight.shape
    D_in_p, _ = _k_tiling(D_in)
    D_out_p = _round_up(D_out, 128)

    w_t = jnp.zeros((D_in_p, D_out_p), mxu_dtype)
    w_t = w_t.at[:D_in, :D_out].set(weight.T.astype(mxu_dtype))

    scale = gamma.astype(jnp.float32) * jax.lax.rsqrt(
        running_var.astype(jnp.float32) + BN_EPS)
    shift = beta.astype(jnp.float32) - running_mean.astype(jnp.float32) * scale

    params = jnp.zeros((8, D_out_p), jnp.float32)
    params = params.at[0, :D_out].set(bias.astype(jnp.float32))
    params = params.at[1, :D_out].set(scale)
    params = params.at[2, :D_out].set(shift)
    return w_t, params, D_out


def eu_forward(x, w_t, params, d_out, *, block_rows=None, out_dtype=None):
    """x: (N, D_in). w_t/params from prepare_eu_params. Returns (N, d_out)."""
    N, D_in = x.shape
    D_in_p, D_out_p = w_t.shape
    mxu_dtype = w_t.dtype
    out_dtype = x.dtype if out_dtype is None else out_dtype

    tk = K_TILE if D_in_p > K_TILE else D_in_p
    nk = D_in_p // tk
    row_align = max(_row_align(mxu_dtype), _row_align(out_dtype))

    budget = _vmem_budget_bytes()
    if block_rows is None:
        # Big tiles on 128 MiB parts (v5e/v6e), smaller on 64 MiB/TC (v7x).
        block_rows = 512 if budget >= 96 * 1024 * 1024 else 256
    tm = min(_round_up(block_rows, row_align), _round_up(N, row_align))
    tm = max(tm, row_align)

    x_bytes = jnp.dtype(mxu_dtype).itemsize
    o_bytes = jnp.dtype(out_dtype).itemsize

    def vmem_usage(rows):
        return (2 * rows * tk * x_bytes                         # x tiles (2-buf)
                + (1 if nk == 1 else 2) * tk * D_out_p * x_bytes  # W^T tiles
                + 8 * D_out_p * 4                               # params slab
                + 2 * rows * D_out_p * o_bytes                  # out tiles (2-buf)
                + rows * D_out_p * 4)                           # f32 accumulator

    while tm > row_align and vmem_usage(tm) > budget:
        tm = max(row_align, _round_up(tm // 2, row_align))

    # Only D_in column padding needs an explicit zero-padded copy (garbage in
    # padded K columns would poison valid rows).  Ragged N is handled by the
    # boundary tile: out-of-bounds rows are per-row garbage that is never
    # written back.
    if D_in_p != D_in:
        x_p = jnp.zeros((N, D_in_p), mxu_dtype).at[:, :D_in].set(
            x.astype(mxu_dtype))
    else:
        x_p = x.astype(mxu_dtype)

    cost = pl.CostEstimate(
        flops=2 * N * D_in_p * D_out_p,
        transcendentals=N,
        bytes_accessed=(N * D_in_p * x_bytes
                        + D_in_p * D_out_p * x_bytes
                        + N * D_out_p * o_bytes),
    )

    out = pl.pallas_call(
        eu_kernel,
        out_shape=jax.ShapeDtypeStruct((N, D_out_p), out_dtype),
        grid_spec=pltpu.PrefetchScalarGridSpec(
            num_scalar_prefetch=0,
            grid=(pl.cdiv(N, tm), nk),
            in_specs=[
                _block_spec((tm, tk), lambda i, k: (i, k)),           # x tile
                _block_spec((tk, D_out_p), lambda i, k: (k, 0),
                            buffers=1 if nk == 1 else None),          # W^T
                _block_spec((8, D_out_p), lambda i, k: (0, 0),
                            buffers=1),                               # params
            ],
            out_specs=pl.BlockSpec((tm, D_out_p), lambda i, k: (i, 0)),
            scratch_shapes=[pltpu.VMEM((tm, D_out_p), jnp.float32)],
        ),
        compiler_params=pltpu.CompilerParams(
            dimension_semantics=("parallel", "arbitrary"),
            vmem_limit_bytes=budget,
        ),
        cost_estimate=cost,
    )(x_p, w_t, params)

    return out[:, :d_out]


def eu_reference(x, weight, bias, gamma, beta, rm, rv):
    y = x @ weight.T + bias
    y = jnp.where(y >= 0, y, NEG_SLOPE * y)
    y = (y - rm) / jnp.sqrt(rv + BN_EPS) * gamma + beta
    n = jnp.sqrt(jnp.sum(y * y, axis=-1, keepdims=True))
    return y / jnp.maximum(n, NORM_EPS)


if __name__ == "__main__":
    N, D_in, D_out = 8, 32, 16

    key = jax.random.PRNGKey(0)
    kx, kw, kb, kg, kbeta, km, kv = jax.random.split(key, 7)

    x = jax.random.normal(kx, (N, D_in), dtype=jnp.float32)
    weight = jax.random.normal(kw, (D_out, D_in), dtype=jnp.float32) * 0.1
    bias = jax.random.normal(kb, (D_out,), dtype=jnp.float32) * 0.1
    gamma = 1.0 + 0.1 * jax.random.normal(kg, (D_out,), dtype=jnp.float32)
    beta = 0.1 * jax.random.normal(kbeta, (D_out,), dtype=jnp.float32)
    running_mean = 0.1 * jax.random.normal(km, (D_out,), dtype=jnp.float32)
    running_var = jnp.abs(jax.random.normal(kv, (D_out,), dtype=jnp.float32)) + 0.5

    ref = eu_reference(x, weight, bias, gamma, beta, running_mean, running_var)

    # f32 MXU path: bit-accurate check against the reference.
    w_t32, p32, d32 = prepare_eu_params(
        weight, bias, gamma, beta, running_mean, running_var,
        mxu_dtype=jnp.float32)
    out32 = jax.block_until_ready(eu_forward(x, w_t32, p32, d32))
    assert out32.shape == (N, D_out)
    assert jnp.allclose(out32, ref, atol=1e-5, rtol=1e-5), float(
        jnp.max(jnp.abs(out32 - ref)))

    # bf16 MXU path (default): halved x/W DMA + W VMEM, ~2x MXU rate.
    w_tb, pb, db = prepare_eu_params(
        weight, bias, gamma, beta, running_mean, running_var)
    outb = jax.block_until_ready(eu_forward(x, w_tb, pb, db))
    assert outb.shape == (N, D_out)
    assert jnp.allclose(outb, ref, atol=5e-2, rtol=5e-2), float(
        jnp.max(jnp.abs(outb - ref)))

    print("KERNEL_OK")
</pallas_src>

<mosaic_0001>
module attributes {stable_mosaic.version = 11 : i64} {
  func.func @eu_kernel(%arg0: i32, %arg1: i32, %arg2: memref<8x128xf32, #tpu.memory_space<vmem>>, %arg3: memref<128x128xf32, #tpu.memory_space<vmem>>, %arg4: memref<8x128xf32, #tpu.memory_space<vmem>>, %arg5: memref<8x128xf32, #tpu.memory_space<vmem>>, %arg6: memref<8x128xf32, #tpu.memory_space<vmem>>) attributes {dimension_semantics = [#tpu.dimension_semantics<parallel>, #tpu.dimension_semantics<arbitrary>], iteration_bounds = array<i64: 1, 1>, scalar_prefetch = 0 : i64, scratch_operands = 1 : i64, tpu.core_type = #tpu.core_type<tc>, window_params = [{transform_indices = @transform_0, window_bounds = array<i64: 8, 128>}, {pipeline_mode = #tpu.pipeline_mode<synchronous>, transform_indices = @transform_1, window_bounds = array<i64: 128, 128>}, {pipeline_mode = #tpu.pipeline_mode<synchronous>, transform_indices = @transform_2, window_bounds = array<i64: 8, 128>}, {transform_indices = @transform_3, window_bounds = array<i64: 8, 128>}]} {
    %c0_i32 = arith.constant 0 : i32
    %0 = arith.cmpi eq, %arg1, %c0_i32 : i32
    %1 = arith.extui %0 : i1 to i32
    %c0_i32_0 = arith.constant 0 : i32
    %2 = arith.cmpi ne, %1, %c0_i32_0 : i32
    scf.if %2 {
      %cst_10 = arith.constant 0.000000e+00 : f32
      %12 = vector.broadcast %cst_10 : f32 to vector<8x128xf32>
      %c0_11 = arith.constant 0 : index
      %c0_12 = arith.constant 0 : index
      %13 = vector.load %arg6[%c0_11, %c0_12] : memref<8x128xf32, #tpu.memory_space<vmem>>, vector<8x128xf32>
      tpu.vector_store %arg6[%c0_11, %c0_12], %12 {strides = array<i32>} : memref<8x128xf32, #tpu.memory_space<vmem>>, vector<8x128xf32>,
    } else {
    }
    %c0 = arith.constant 0 : index
    %c0_1 = arith.constant 0 : index
    %3 = vector.load %arg6[%c0, %c0_1] : memref<8x128xf32, #tpu.memory_space<vmem>>, vector<8x128xf32>
    %c0_2 = arith.constant 0 : index
    %c0_3 = arith.constant 0 : index
    %4 = vector.load %arg2[%c0_2, %c0_3] : memref<8x128xf32, #tpu.memory_space<vmem>>, vector<8x128xf32>
    %c0_4 = arith.constant 0 : index
    %c0_5 = arith.constant 0 : index
    %5 = vector.load %arg3[%c0_4, %c0_5] : memref<128x128xf32, #tpu.memory_space<vmem>>, vector<128x128xf32>
    %cst = arith.constant dense<0.000000e+00> : vector<8x128xf32>
    %6 = tpu.matmul %4, %5, %cst {dimension_numbers = #tpu.dot_dimension_numbers<[1], [0], [0], [1], [0, 0, 1, 1], [], []>} : vector<8x128xf32>, vector<128x128xf32>, vector<8x128xf32> -> vector<8x128xf32>
    %7 = arith.addf %3, %6 : vector<8x128xf32>
    %c0_6 = arith.constant 0 : index
    %c0_7 = arith.constant 0 : index
    %8 = vector.load %arg6[%c0_6, %c0_7] : memref<8x128xf32, #tpu.memory_space<vmem>>, vector<8x128xf32>
    tpu.vector_store %arg6[%c0_6, %c0_7], %7 {strides = array<i32>} : memref<8x128xf32, #tpu.memory_space<vmem>>, vector<8x128xf32>,
    %c0_i32_8 = arith.constant 0 : i32
    %9 = arith.cmpi eq, %arg1, %c0_i32_8 : i32
    %10 = arith.extui %9 : i1 to i32
    %c0_i32_9 = arith.constant 0 : i32
    %11 = arith.cmpi ne, %10, %c0_i32_9 : i32
    scf.if %11 {
      %c0_10 = arith.constant 0 : index
      %c0_11 = arith.constant 0 : index
      %12 = vector.load %arg6[%c0_10, %c0_11] : memref<8x128xf32, #tpu.memory_space<vmem>>, vector<8x128xf32>
      %c0_12 = arith.constant 0 : index
      %c0_13 = arith.constant 0 : index
      %13 = vector.load %arg4[%c0_12, %c0_13] : memref<8x128xf32, #tpu.memory_space<vmem>>, vector<1x128xf32>
      %14 = vector.broadcast %13 : vector<1x128xf32> to vector<8x128xf32>
      %15 = arith.addf %12, %14 : vector<8x128xf32>
      %cst_14 = arith.constant 0.00999999977 : f32
      %16 = vector.broadcast %cst_14 : f32 to vector<8x128xf32>
      %17 = arith.mulf %16, %15 : vector<8x128xf32>
      %18 = arith.maximumf %15, %17 : vector<8x128xf32>
      %c1 = arith.constant 1 : index
      %c0_15 = arith.constant 0 : index
      %19 = vector.load %arg4[%c1, %c0_15] : memref<8x128xf32, #tpu.memory_space<vmem>>, vector<1x128xf32>
      %20 = vector.broadcast %19 : vector<1x128xf32> to vector<8x128xf32>
      %21 = arith.mulf %18, %20 : vector<8x128xf32>
      %c2 = arith.constant 2 : index
      %c0_16 = arith.constant 0 : index
      %22 = vector.load %arg4[%c2, %c0_16] : memref<8x128xf32, #tpu.memory_space<vmem>>, vector<1x128xf32>
      %23 = vector.broadcast %22 : vector<1x128xf32> to vector<8x128xf32>
      %24 = arith.addf %21, %23 : vector<8x128xf32>
      %25 = arith.mulf %24, %24 : vector<8x128xf32>
      %cst_17 = arith.constant dense<0.000000e+00> : vector<8xf32>
      %26 = vector.multi_reduction <add>, %25, %cst_17 [1] : vector<8x128xf32> to vector<8xf32>
      %27 = vector.shape_cast %26 : vector<8xf32> to vector<8x1xf32>
      %cst_18 = arith.constant 1.000000e-24 : f32
      %28 = vector.broadcast %cst_18 : f32 to vector<8x1xf32>
      %29 = arith.maximumf %27, %28 : vector<8x1xf32>
      %30 = math.rsqrt %29 : vector<8x1xf32>
      %31 = vector.broadcast %30 : vector<8x1xf32> to vector<8x128xf32>
      %32 = arith.mulf %24, %31 : vector<8x128xf32>
      %c0_19 = arith.constant 0 : index
      %c0_20 = arith.constant 0 : index
      %33 = vector.load %arg5[%c0_19, %c0_20] : memref<8x128xf32, #tpu.memory_space<vmem>>, vector<8x128xf32>
      tpu.vector_store %arg5[%c0_19, %c0_20], %32 {strides = array<i32>} : memref<8x128xf32, #tpu.memory_space<vmem>>, vector<8x128xf32>,
    } else {
    }
    return
  }
  func.func @transform_0(%arg0: i32, %arg1: i32) -> (i32, i32) {
    %c0_i32 = arith.constant 0 : i32
    return %arg0, %arg1 : i32, i32
  }
  func.func @transform_1(%arg0: i32, %arg1: i32) -> (i32, i32) {
    %c0_i32 = arith.constant 0 : i32
    %c0_i32_0 = arith.constant 0 : i32
    return %arg1, %c0_i32 : i32, i32
  }
  func.func @transform_2(%arg0: i32, %arg1: i32) -> (i32, i32) {
    %c0_i32 = arith.constant 0 : i32
    %c0_i32_0 = arith.constant 0 : i32
    %c0_i32_1 = arith.constant 0 : i32
    return %c0_i32, %c0_i32_0 : i32, i32
  }
  func.func @transform_3(%arg0: i32, %arg1: i32) -> (i32, i32) {
    %c0_i32 = arith.constant 0 : i32
    %c0_i32_0 = arith.constant 0 : i32
    return %arg0, %c0_i32 : i32, i32
  }
}

</mosaic_0001>

<llo_original>
// kernel: tpu_custom_call.1
$region0: #{tpu_custom_call.1}
  #allocation0 [shape = 'u32[]', space=smem, size = 0x4, offset = 0x4, fixed_abs, tag = 'smem constant byte address 0x4 - core index']
  #allocation1 [shape = 'u32[144,128]{1,0:T(1,128)}', space=vmem, size = 0x12000, scoped, tag = 'internal scratch']
  #allocation2 [shape = 'f32[8,128]{1,0:T(8,128)}', space=vmem, size = 0x1000, scoped, tag = 'scratch operand']
  %s0 = inlined_call_operand.hbm [shape: f32[8,128], index: 0, kind: input, shape index: {}]
  %s1 = inlined_call_operand.hbm [shape: f32[128,128], index: 1, kind: input, shape index: {}]
  %s2 = inlined_call_operand.hbm [shape: f32[8,128], index: 2, kind: input, shape index: {}]
  %s3 = inlined_call_operand.hbm [shape: f32[8,128], index: 3, kind: output, shape index: {}]
  %s4 = sld [smem:[#allocation0]]
  $region42: #{tpu_custom_call.1} parent=0
    _
  %s6 = ssub.s32 1, %s4
  %s7 = scalar_select 0, %s6, %s4
  $region1: #{tpu_custom_call.1} parent=0
    #allocation3 [shape = 'u8[4096]{0}', space=vmem, size = 0x1000, scoped, tag = 'input window, operand 0, single buffered']
    #allocation4 [shape = 's32[1]{0}', space=sflag, size = 0x4, scoped, tag = 'scoped memory for tpu_custom_call.1']
    #allocation5 [shape = 's32[1]{0}', space=sflag, size = 0x4, scoped, tag = 'scoped memory for tpu_custom_call.1']
    #allocation6 [shape = 'u8[65536]{0}', space=vmem, size = 0x10000, scoped, tag = 'input window, operand 1, single buffered']
    #allocation7 [shape = 's32[1]{0}', space=sflag, size = 0x4, scoped, tag = 'scoped memory for tpu_custom_call.1']
    #allocation8 [shape = 'u8[4096]{0}', space=vmem, size = 0x1000, scoped, tag = 'input window, operand 2, single buffered']
    #allocation9 [shape = 'u8[4096]{0}', space=vmem, size = 0x1000, scoped, tag = 'output window, operand 0, single buffered']
    %8 = vsyncpa [#allocation4], 0
    %9 = vsyncpa [#allocation7], 0
    %10 = vsyncpa [#allocation5], 0
    // Predicated region
    $region2: #{tpu_custom_call.1} parent=1 // pred_check
      _
    $region3: #{tpu_custom_call.1} parent=1 // pred_check_branch
      %12 = sbr.rel (0) target = $region5
    $region4: #{tpu_custom_call.1} parent=1 // pred_region
      %s14 = ssub.s32 128, 128
      %15 = vsyncadd [#allocation4], %s14
      %s17 = sshll.u32 [#allocation3], 4
      %s18 = int_to_ptr.vmem [resolvable:$true] %s17
      %20 = dma.hbm_to_vmem [thread:$0]  %s0, 128, %s18, [#allocation4]
    $region5: #{tpu_custom_call.1} parent=1 // pred_fallthru
      _
    // Predicated region
    $region6: #{tpu_custom_call.1} parent=1 // pred_check
      _
    $region7: #{tpu_custom_call.1} parent=1 // pred_check_branch
      %22 = sbr.rel (0) target = $region9
    $region8: #{tpu_custom_call.1} parent=1 // pred_region
      %s24 = ssub.s32 2048, 2048
      %25 = vsyncadd [#allocation7], %s24
      %s26 = sshll.u32 [#allocation6], 4
      %s27 = int_to_ptr.vmem [resolvable:$true] %s26
      %32 = dma.hbm_to_vmem [thread:$0]  %s1, 2048, %s27, [#allocation7], 128, 128, 8
    $region9: #{tpu_custom_call.1} parent=1 // pred_fallthru
      _
    // Predicated region
    $region10: #{tpu_custom_call.1} parent=1 // pred_check
      _
    $region11: #{tpu_custom_call.1} parent=1 // pred_check_branch
      %34 = sbr.rel (0) target = $region13
    $region12: #{tpu_custom_call.1} parent=1 // pred_region
      %s36 = ssub.s32 128, 128
      %37 = vsyncadd [#allocation7], %s36
      %s39 = sshll.u32 [#allocation8], 4
      %s40 = int_to_ptr.vmem [resolvable:$true] %s39
      %42 = dma.hbm_to_vmem [thread:$0]  %s2, 128, %s40, [#allocation7]
    $region13: #{tpu_custom_call.1} parent=1 // pred_fallthru
      _
    // Predicated region
    $region14: #{tpu_custom_call.1} parent=1 // pred_check
      _
    $region15: #{tpu_custom_call.1} parent=1 // pred_check_branch
      %44 = sbr.rel (0) target = $region17
    $region16: #{tpu_custom_call.1} parent=1 // pred_region
      %45 = dma.done [#allocation4], 128
    $region17: #{tpu_custom_call.1} parent=1 // pred_fallthru
      _
    // Predicated region
    $region18: #{tpu_custom_call.1} parent=1 // pred_check
      _
    $region19: #{tpu_custom_call.1} parent=1 // pred_check_branch
      %47 = sbr.rel (0) target = $region21
    $region20: #{tpu_custom_call.1} parent=1 // pred_region
      %48 = dma.done [#allocation7], 2048
    $region21: #{tpu_custom_call.1} parent=1 // pred_fallthru
      _
    // Predicated region
    $region22: #{tpu_custom_call.1} parent=1 // pred_check
      _
    $region23: #{tpu_custom_call.1} parent=1 // pred_check_branch
      %50 = sbr.rel (0) target = $region25
    $region24: #{tpu_custom_call.1} parent=1 // pred_region
      %51 = dma.done [#allocation7], 128
    $region25: #{tpu_custom_call.1} parent=1 // pred_fallthru
      _
    %p52 = scmp.eq.s32.totalorder 0, 0
    // Predicated region
    $region26: #{tpu_custom_call.1} parent=1 // pred_check
      %p53 = pneg %p52
    $region27: #{tpu_custom_call.1} parent=1 // pred_check_branch
      %55 = sbr.rel (%p53) target = $region29
    $region28: #{tpu_custom_call.1} parent=1 // pred_region
      %56 = vst [vmem:[#allocation2] sm:$0xff] 0.0
    $region29: #{tpu_custom_call.1} parent=1 // pred_fallthru
      _
    %v57 = vld [vmem:[#allocation2] sm:$0xff]
    %v58 = vld [vmem:[#allocation3] sm:$0xff]
    %v59 = vld [vmem:[#allocation6] sm:$0xff]
    %v60 = vld [vmem:[#allocation6 + $0x8] sm:$0xff]
    %v61 = vld [vmem:[#allocation6 + $0x10] sm:$0xff]
    %v62 = vld [vmem:[#allocation6 + $0x18] sm:$0xff]
    %v63 = vld [vmem:[#allocation6 + $0x20] sm:$0xff]
    %v64 = vld [vmem:[#allocation6 + $0x28] sm:$0xff]
    %v65 = vld [vmem:[#allocation6 + $0x30] sm:$0xff]
    %v66 = vld [vmem:[#allocation6 + $0x38] sm:$0xff]
    %v67 = vld [vmem:[#allocation6 + $0x40] sm:$0xff]
    %v68 = vld [vmem:[#allocation6 + $0x48] sm:$0xff]
    %v69 = vld [vmem:[#allocation6 + $0x50] sm:$0xff]
    %v70 = vld [vmem:[#allocation6 + $0x58] sm:$0xff]
    %v71 = vld [vmem:[#allocation6 + $0x60] sm:$0xff]
    %v72 = vld [vmem:[#allocation6 + $0x68] sm:$0xff]
    %v73 = vld [vmem:[#allocation6 + $0x70] sm:$0xff]
    %v74 = vld [vmem:[#allocation6 + $0x78] sm:$0xff]
    %75 = vmatprep.subr.mxu0 0.0
    %76 = vmatpush1.msra.mxu0 %v59
    %77 = vmatprep.subr.mxu0 0.0
    %78 = vmatpush1.msra.mxu0 %v60
    %79 = vmatprep.subr.mxu0 0.0
    %80 = vmatpush1.msra.mxu0 %v61
    %81 = vmatprep.subr.mxu0 0.0
    %82 = vmatpush1.msra.mxu0 %v62
    %83 = vmatprep.subr.mxu0 0.0
    %84 = vmatpush1.msra.mxu0 %v63
    %85 = vmatprep.subr.mxu0 0.0
    %86 = vmatpush1.msra.mxu0 %v64
    %87 = vmatprep.subr.mxu0 0.0
    %88 = vmatpush1.msra.mxu0 %v65
    %89 = vmatprep.subr.mxu0 0.0
    %90 = vmatpush1.msra.mxu0 %v66
    %91 = vmatprep.subr.mxu0 0.0
    %92 = vmatpush1.msra.mxu0 %v67
    %93 = vmatprep.subr.mxu0 0.0
    %94 = vmatpush1.msra.mxu0 %v68
    %95 = vmatprep.subr.mxu0 0.0
    %96 = vmatpush1.msra.mxu0 %v69
    %97 = vmatprep.subr.mxu0 0.0
    %98 = vmatpush1.msra.mxu0 %v70
    %99 = vmatprep.subr.mxu0 0.0
    %100 = vmatpush1.msra.mxu0 %v71
    %101 = vmatprep.subr.mxu0 0.0
    %102 = vmatpush1.msra.mxu0 %v72
    %103 = vmatprep.subr.mxu0 0.0
    %104 = vmatpush1.msra.mxu0 %v73
    %105 = vmatprep.subr.mxu0 0.0
    %106 = vmatpush1.msra.mxu0 %v74
    %107 = vmatprep.subr.mxu0 0.0
    %108 = vmatpush1.msra.mxu0 0.0
    %109 = vmatprep.subr.mxu0 0.0
    %110 = vmatpush1.msra.mxu0 0.0
    %111 = vmatprep.subr.mxu0 0.0
    %112 = vmatpush1.msra.mxu0 0.0
    %113 = vmatprep.subr.mxu0 0.0
    %114 = vmatpush1.msra.mxu0 0.0
    %115 = vmatprep.subr.mxu0 0.0
    %116 = vmatpush1.msra.mxu0 0.0
    %117 = vmatprep.subr.mxu0 0.0
    %118 = vmatpush1.msra.mxu0 0.0
    %119 = vmatprep.subr.mxu0 0.0
    %120 = vmatpush1.msra.mxu0 0.0
    %121 = vmatprep.subr.mxu0 0.0
    %122 = vmatpush1.msra.mxu0 0.0
    %123 = vmatprep.subr.mxu0 0.0
    %124 = vmatpush1.msra.mxu0 0.0
    %125 = vmatprep.subr.mxu0 0.0
    %126 = vmatpush1.msra.mxu0 0.0
    %127 = vmatprep.subr.mxu0 0.0
    %128 = vmatpush1.msra.mxu0 0.0
    %129 = vmatprep.subr.mxu0 0.0
    %130 = vmatpush1.msra.mxu0 0.0
    %131 = vmatprep.subr.mxu0 0.0
    %132 = vmatpush1.msra.mxu0 0.0
    %133 = vmatprep.subr.mxu0 0.0
    %134 = vmatpush1.msra.mxu0 0.0
    %135 = vmatprep.subr.mxu0 0.0
    %136 = vmatpush1.msra.mxu0 0.0
    %137 = vmatprep.subr.mxu0 0.0
    %138 = vmatpush1.msra.mxu0 0.0
    %139 = vmatprep.mubr.f32.mxu0 0.0
    %140 = vmatmul.mubr.f32.gmra.mrb[0].mxu0 %v58
    %v141 = vpop.f32.mrb[0].mxu0
    %v142 = vadd.f32 0.0, %v141
    %v143 = vpop.f32.mrb[0].mxu0
    %144 = vdwg.mxu0
    %v145 = vadd.f32 %v57, %v142
    %146 = vst [vmem:[#allocation2] sm:$0xff] %v145
    // Predicated region
    $region30: #{tpu_custom_call.1} parent=1 // pred_check
      %p147 = pneg %p52
    $region31: #{tpu_custom_call.1} parent=1 // pred_check_branch
      %149 = sbr.rel (%p147) target = $region33
    $region32: #{tpu_custom_call.1} parent=1 // pred_region
      %v150 = vld [vmem:[#allocation2] sm:$0xff]
      %v151 = vld [vmem:[#allocation8] sm:$0x1]
      %v152 = vlaneseq
      %v153 = vshrl.u32 %v152, 7
      %v154 = vsub.s32 0, %v153
      %v155 = vrot.slane %v151, %v154
      %v156 = vadd.f32 %v150, %v155
      %v157 = vmul.f32 %v156, 0.01
      %v158 = vmax.f32 %v156, %v157
      %v159 = vld [vmem:[#allocation8 + $0x1] sm:$0x1]
      %v160 = vlaneseq
      %v161 = vshrl.u32 %v160, 7
      %v162 = vsub.s32 0, %v161
      %v163 = vrot.slane %v159, %v162
      %v164 = vmul.f32 %v158, %v163
      %v165 = vld [vmem:[#allocation8 + $0x2] sm:$0x1]
      %v166 = vlaneseq
      %v167 = vshrl.u32 %v166, 7
      %v168 = vsub.s32 0, %v167
      %v169 = vrot.slane %v165, %v168
      %v170 = vadd.f32 %v164, %v169
      %v171 = vmul.f32 %v170, %v170
      %172 = vadd.xlane.f32.xlu0 %v171
      %v173 = vpop.xlane.xlu0 %172
      %v174 = vmax.f32 %v173, 1e-24
      %v175 = vrsqrt.pop %v174
      %v176 = vmul.f32 %v170, %v175
      %177 = vst [vmem:[#allocation9] sm:$0xff] %v176
    $region33: #{tpu_custom_call.1} parent=1 // pred_fallthru
      _
    // Predicated region
    $region34: #{tpu_custom_call.1} parent=1 // pred_check
      _
    $region35: #{tpu_custom_call.1} parent=1 // pred_check_branch
      %179 = sbr.rel (0) target = $region37
    $region36: #{tpu_custom_call.1} parent=1 // pred_region
      %s181 = ssub.s32 128, 128
      %182 = vsyncadd [#allocation5], %s181
      %s184 = sshll.u32 [#allocation9], 4
      %s185 = int_to_ptr.vmem [resolvable:$true] %s184
      %187 = dma.vmem_to_hbm [thread:$0]  %s185, 128, %s3, [#allocation5]
    $region37: #{tpu_custom_call.1} parent=1 // pred_fallthru
      _
    // Predicated region
    $region38: #{tpu_custom_call.1} parent=1 // pred_check
      _
    $region39: #{tpu_custom_call.1} parent=1 // pred_check_branch
      %189 = sbr.rel (0) target = $region41
    $region40: #{tpu_custom_call.1} parent=1 // pred_region
      %190 = dma.done [#allocation5], 128
    $region41: #{tpu_custom_call.1} parent=1 // pred_fallthru
      _
    %191 = vsyncpa [#allocation4], 1
    %192 = vsyncpa [#allocation7], 1
    %193 = vsyncpa [#allocation5], 1

</llo_original>
